<compile_context>
chip_gen: v7x
topology: tpu7x:2x2x1
jax: 0.10.0
libtpu: 0.0.40
codegen_flags: <defaults>
</compile_context>

<pallas_src>
import math

import jax
import jax.numpy as jnp
from jax.experimental import pallas as pl
from jax.experimental.pallas import tpu as pltpu


def token_embedding_kernel(x_ref, halo_ref, w_ref, o_ref):
    """One (batch, L-tile) grid step of the circular k=3 conv.

    x_ref    : (TL, C)    current L-tile of the input
    halo_ref : (2, C)     x[(start-1) % L] and x[(start+TL) % L] for this tile
    w_ref    : (3, C, D)  conv taps [prev, center, next]
    o_ref    : (TL, D)
    """
    x = x_ref[...]                      # (TL, C)
    halo = halo_ref[...]                # (2, C)
    tl = x.shape[0]

    # Neighbour taps via XLU sublane rolls; fix the boundary rows with the halo
    # (when TL == L the roll wrap-around already equals the halo rows).
    x_prev = pltpu.roll(x, shift=1, axis=0)        # x_prev[i] = x[i-1]
    x_next = pltpu.roll(x, shift=tl - 1, axis=0)   # x_next[i] = x[i+1]
    row = jax.lax.broadcasted_iota(jnp.int32, x.shape, 0)
    x_prev = jnp.where(row == 0, halo[0:1, :], x_prev)
    x_next = jnp.where(row == tl - 1, halo[1:2, :], x_next)

    acc = jnp.dot(x_prev, w_ref[0], preferred_element_type=jnp.float32)
    acc = acc + jnp.dot(x, w_ref[1], preferred_element_type=jnp.float32)
    acc = acc + jnp.dot(x_next, w_ref[2], preferred_element_type=jnp.float32)
    o_ref[...] = acc.astype(o_ref.dtype)


def _pad2(rows, cols, itemsize):
    """Padded VMEM bytes of a 2-D tile: lanes pad to 128, sublanes to 8/16/32."""
    sub = 8 * max(1, 4 // itemsize)
    rp = -(-rows // sub) * sub
    cp = -(-cols // 128) * 128
    return rp * cp * itemsize


def _vmem_budget():
    """(per-step padded-byte budget, vmem_limit cap) for this generation."""
    vmem_total = 64 << 20                       # conservative default (v7x per-TC)
    try:
        info = pltpu.get_tpu_info()
        vmem_total = int(getattr(info, "vmem_capacity_bytes", vmem_total))
    except Exception:
        pass
    if vmem_total <= (64 << 20):                # v7x-class: 64 MiB physical / TC
        return 18 << 20, 36 << 20
    return 56 << 20, 96 << 20                   # v5e / v6e: 128 MiB physical


def _choose_tl(B, L, step_bytes, sub_req, budget):
    """Largest legal row tile that fits the padded-VMEM budget."""
    tiled = [t for t in range(sub_req, L, sub_req)
             if L % t == 0 and step_bytes(t) <= budget]
    best_tiled = max(tiled) if tiled else None
    full_fits = step_bytes(L) <= budget
    if B == 1 and best_tiled is not None:
        # >=2 grid steps on a "parallel" axis so both v7x TensorCores get work.
        return best_tiled
    if full_fits:
        return L
    return best_tiled if best_tiled is not None else L  # TL=L is always legal


def token_embedding(x, w, *, out_dtype=None):
    """x: (B, L, c_in), w: (3, c_in, d_model) taps [prev, center, next]
    -> (B, L, d_model).

    Compute dtype follows x.dtype (keep activations bf16 upstream for the bf16
    MXU/DMA path); accumulation is always f32.
    """
    B, L, C = x.shape
    D = w.shape[2]
    out_dtype = x.dtype if out_dtype is None else out_dtype
    w = w.astype(x.dtype)                       # weight is tiny; cast is free

    in_isz = jnp.dtype(x.dtype).itemsize
    out_isz = jnp.dtype(out_dtype).itemsize
    sub_req = max(8 * max(1, 4 // in_isz), 8 * max(1, 4 // out_isz))

    def step_bytes(tl):
        # double-buffered x tile, halo, output tile, plus the (small) weight
        return 2 * (_pad2(tl, C, in_isz) + _pad2(2, C, in_isz)
                    + 3 * _pad2(C, D, in_isz) + _pad2(tl, D, out_isz))

    budget, vmem_cap = _vmem_budget()
    TL = _choose_tl(B, L, step_bytes, sub_req, budget)
    NT = L // TL
    vmem_limit = int(min(max(step_bytes(TL) + (4 << 20), 16 << 20), vmem_cap))

    # Tiny circular halo (2 rows per tile): rows (t*TL - 1) % L and (t*TL + TL) % L.
    starts = jnp.arange(NT) * TL
    prev_idx = (starts - 1) % L
    next_idx = (starts + TL) % L
    halo = jnp.stack([x[:, prev_idx, :], x[:, next_idx, :]], axis=2)  # (B, NT, 2, C)

    return pl.pallas_call(
        token_embedding_kernel,
        out_shape=jax.ShapeDtypeStruct((B, L, D), out_dtype),
        grid_spec=pltpu.PrefetchScalarGridSpec(
            num_scalar_prefetch=0,
            grid=(B, NT),
            in_specs=[
                pl.BlockSpec((None, TL, C), lambda b, l: (b, l, 0)),
                pl.BlockSpec((None, None, 2, C), lambda b, l: (b, l, 0, 0)),
                pl.BlockSpec((3, C, D), lambda b, l: (0, 0, 0)),  # resident weight
            ],
            out_specs=pl.BlockSpec((None, TL, D), lambda b, l: (b, l, 0)),
        ),
        compiler_params=pltpu.CompilerParams(
            dimension_semantics=("parallel", "parallel"),
            vmem_limit_bytes=vmem_limit,
        ),
    )(x, halo, w)


def init_conv_weight(key, c_in, d_model):
    """Deterministic kaiming_normal_(mode='fan_in', nonlinearity='leaky_relu').

    PyTorch weight shape is (d_model, c_in, 3); fan_in = c_in * 3,
    gain = sqrt(2 / (1 + 0.01**2)), std = gain / sqrt(fan_in).
    """
    fan_in = c_in * 3
    gain = math.sqrt(2.0 / (1.0 + 0.01 ** 2))
    std = gain / math.sqrt(fan_in)
    w_torch_layout = jax.random.normal(key, (d_model, c_in, 3), jnp.float32) * std
    # -> kernel layout (3, c_in, d_model)
    return jnp.transpose(w_torch_layout, (2, 1, 0)), w_torch_layout


def reference(x, w_kernel_layout):
    """Pure-JAX reference of the circular conv (sanity check)."""
    out = jnp.zeros(x.shape[:2] + (w_kernel_layout.shape[2],), jnp.float32)
    for k in range(3):
        xs = jnp.roll(x, shift=1 - k, axis=1)   # xs[:, l] = x[:, (l + k - 1) % L]
        out = out + jnp.einsum("blc,cd->bld", xs, w_kernel_layout[k])
    return out


if __name__ == "__main__":
    B, L, c_in, d_model = 2, 16, 8, 32

    key = jax.random.PRNGKey(0)
    kx, kw = jax.random.split(key)
    x = jax.random.normal(kx, (B, L, c_in), jnp.float32)
    w, _ = init_conv_weight(kw, c_in, d_model)

    ref = reference(x, w)

    # f32 path (matches PyTorch forward numerics).
    out = jax.block_until_ready(token_embedding(x, w))
    assert out.shape == (B, L, d_model)
    assert jnp.allclose(out, ref, atol=1e-5, rtol=1e-5)

    # bf16-resident-activation path (bf16 MXU/DMA on v6e/v7x); f32 accumulation.
    out_bf16 = jax.block_until_ready(
        token_embedding(x.astype(jnp.bfloat16), w, out_dtype=jnp.bfloat16)
    )
    assert out_bf16.shape == (B, L, d_model)
    assert jnp.allclose(out_bf16.astype(jnp.float32), ref, atol=6e-2, rtol=6e-2)

    print("KERNEL_OK")
</pallas_src>

<mosaic_0001>
module attributes {stable_mosaic.version = 11 : i64} {
  func.func @token_embedding_kernel(%arg0: i32, %arg1: i32, %arg2: memref<1x16x8xf32, #tpu.memory_space<vmem>>, %arg3: memref<1x1x2x8xf32, #tpu.memory_space<vmem>>, %arg4: memref<3x8x32xf32, #tpu.memory_space<vmem>>, %arg5: memref<1x16x32xf32, #tpu.memory_space<vmem>>) attributes {dimension_semantics = [#tpu.dimension_semantics<parallel>, #tpu.dimension_semantics<parallel>], iteration_bounds = array<i64: 2, 1>, scalar_prefetch = 0 : i64, scratch_operands = 0 : i64, tpu.core_type = #tpu.core_type<tc>, window_params = [{transform_indices = @transform_0, window_bounds = array<i64: 1, 16, 8>}, {transform_indices = @transform_1, window_bounds = array<i64: 1, 1, 2, 8>}, {pipeline_mode = #tpu.pipeline_mode<synchronous>, transform_indices = @transform_2, window_bounds = array<i64: 3, 8, 32>}, {transform_indices = @transform_3, window_bounds = array<i64: 1, 16, 32>}]} {
    %c0 = arith.constant 0 : index
    %c0_0 = arith.constant 0 : index
    %c0_1 = arith.constant 0 : index
    %0 = vector.load %arg2[%c0, %c0_0, %c0_1] : memref<1x16x8xf32, #tpu.memory_space<vmem>>, vector<1x16x8xf32>
    %1 = vector.shape_cast %0 : vector<1x16x8xf32> to vector<16x8xf32>
    %c0_2 = arith.constant 0 : index
    %c0_3 = arith.constant 0 : index
    %c0_4 = arith.constant 0 : index
    %c0_5 = arith.constant 0 : index
    %2 = vector.load %arg3[%c0_2, %c0_3, %c0_4, %c0_5] : memref<1x1x2x8xf32, #tpu.memory_space<vmem>>, vector<1x1x2x8xf32>
    %3 = vector.shape_cast %2 : vector<1x1x2x8xf32> to vector<2x8xf32>
    %c1_i32 = arith.constant 1 : i32
    %4 = tpu.dynamic_rotate %1 by %c1_i32 dim 0 : vector<16x8xf32>, i32 -> vector<16x8xf32>
    %c15_i32 = arith.constant 15 : i32
    %5 = tpu.dynamic_rotate %1 by %c15_i32 dim 0 : vector<16x8xf32>, i32 -> vector<16x8xf32>
    %6 = tpu.iota {dimensions = array<i32: 0>} : vector<16x8xi32>
    %c0_i32 = arith.constant 0 : i32
    %7 = vector.broadcast %c0_i32 : i32 to vector<16x8xi32>
    %8 = arith.cmpi eq, %6, %7 : vector<16x8xi32>
    %9 = vector.extract_strided_slice %3 {offsets = [0, 0], sizes = [1, 8], strides = [1, 1]} : vector<2x8xf32> to vector<1x8xf32>
    %10 = vector.shape_cast %9 : vector<1x8xf32> to vector<1x8xf32>
    %11 = vector.broadcast %10 : vector<1x8xf32> to vector<16x8xf32>
    %12 = arith.select %8, %11, %4 : vector<16x8xi1>, vector<16x8xf32>
    %c15_i32_6 = arith.constant 15 : i32
    %13 = vector.broadcast %c15_i32_6 : i32 to vector<16x8xi32>
    %14 = arith.cmpi eq, %6, %13 : vector<16x8xi32>
    %15 = vector.extract_strided_slice %3 {offsets = [1, 0], sizes = [1, 8], strides = [1, 1]} : vector<2x8xf32> to vector<1x8xf32>
    %16 = vector.shape_cast %15 : vector<1x8xf32> to vector<1x8xf32>
    %17 = vector.broadcast %16 : vector<1x8xf32> to vector<16x8xf32>
    %18 = arith.select %14, %17, %5 : vector<16x8xi1>, vector<16x8xf32>
    %c0_7 = arith.constant 0 : index
    %c0_8 = arith.constant 0 : index
    %c0_9 = arith.constant 0 : index
    %19 = vector.load %arg4[%c0_7, %c0_8, %c0_9] : memref<3x8x32xf32, #tpu.memory_space<vmem>>, vector<1x8x32xf32>
    %20 = vector.shape_cast %19 : vector<1x8x32xf32> to vector<8x32xf32>
    %cst = arith.constant dense<0.000000e+00> : vector<16x32xf32>
    %21 = tpu.matmul %12, %20, %cst {dimension_numbers = #tpu.dot_dimension_numbers<[1], [0], [0], [1], [0, 0, 1, 1], [], []>} : vector<16x8xf32>, vector<8x32xf32>, vector<16x32xf32> -> vector<16x32xf32>
    %c1 = arith.constant 1 : index
    %c0_10 = arith.constant 0 : index
    %c0_11 = arith.constant 0 : index
    %22 = vector.load %arg4[%c1, %c0_10, %c0_11] : memref<3x8x32xf32, #tpu.memory_space<vmem>>, vector<1x8x32xf32>
    %23 = vector.shape_cast %22 : vector<1x8x32xf32> to vector<8x32xf32>
    %cst_12 = arith.constant dense<0.000000e+00> : vector<16x32xf32>
    %24 = tpu.matmul %1, %23, %cst_12 {dimension_numbers = #tpu.dot_dimension_numbers<[1], [0], [0], [1], [0, 0, 1, 1], [], []>} : vector<16x8xf32>, vector<8x32xf32>, vector<16x32xf32> -> vector<16x32xf32>
    %25 = arith.addf %21, %24 : vector<16x32xf32>
    %c2 = arith.constant 2 : index
    %c0_13 = arith.constant 0 : index
    %c0_14 = arith.constant 0 : index
    %26 = vector.load %arg4[%c2, %c0_13, %c0_14] : memref<3x8x32xf32, #tpu.memory_space<vmem>>, vector<1x8x32xf32>
    %27 = vector.shape_cast %26 : vector<1x8x32xf32> to vector<8x32xf32>
    %cst_15 = arith.constant dense<0.000000e+00> : vector<16x32xf32>
    %28 = tpu.matmul %18, %27, %cst_15 {dimension_numbers = #tpu.dot_dimension_numbers<[1], [0], [0], [1], [0, 0, 1, 1], [], []>} : vector<16x8xf32>, vector<8x32xf32>, vector<16x32xf32> -> vector<16x32xf32>
    %29 = arith.addf %25, %28 : vector<16x32xf32>
    %c0_16 = arith.constant 0 : index
    %c0_17 = arith.constant 0 : index
    %c0_18 = arith.constant 0 : index
    %30 = vector.load %arg5[%c0_16, %c0_17, %c0_18] : memref<1x16x32xf32, #tpu.memory_space<vmem>>, vector<1x16x32xf32>
    %31 = vector.shape_cast %30 : vector<1x16x32xf32> to vector<16x32xf32>
    %32 = vector.shape_cast %29 : vector<16x32xf32> to vector<1x16x32xf32>
    tpu.vector_store %arg5[%c0_16, %c0_17, %c0_18], %32 {strides = array<i32>} : memref<1x16x32xf32, #tpu.memory_space<vmem>>, vector<1x16x32xf32>,
    return
  }
  func.func @transform_0(%arg0: i32, %arg1: i32) -> (i32, i32, i32) {
    %c0_i32 = arith.constant 0 : i32
    %c0_i32_0 = arith.constant 0 : i32
    return %arg0, %arg1, %c0_i32 : i32, i32, i32
  }
  func.func @transform_1(%arg0: i32, %arg1: i32) -> (i32, i32, i32, i32) {
    %c0_i32 = arith.constant 0 : i32
    %c0_i32_0 = arith.constant 0 : i32
    %c0_i32_1 = arith.constant 0 : i32
    return %arg0, %arg1, %c0_i32, %c0_i32_0 : i32, i32, i32, i32
  }
  func.func @transform_2(%arg0: i32, %arg1: i32) -> (i32, i32, i32) {
    %c0_i32 = arith.constant 0 : i32
    %c0_i32_0 = arith.constant 0 : i32
    %c0_i32_1 = arith.constant 0 : i32
    %c0_i32_2 = arith.constant 0 : i32
    return %c0_i32, %c0_i32_0, %c0_i32_1 : i32, i32, i32
  }
  func.func @transform_3(%arg0: i32, %arg1: i32) -> (i32, i32, i32) {
    %c0_i32 = arith.constant 0 : i32
    %c0_i32_0 = arith.constant 0 : i32
    return %arg0, %arg1, %c0_i32 : i32, i32, i32
  }
}

</mosaic_0001>

<llo_original>
// kernel: tpu_custom_call.1
$region0: #{tpu_custom_call.1}
  #allocation0 [shape = 'u32[]', space=smem, size = 0x4, offset = 0x4, fixed_abs, tag = 'smem constant byte address 0x4 - core index']
  #allocation1 [shape = 'u32[144,128]{1,0:T(1,128)}', space=vmem, size = 0x12000, scoped, tag = 'internal scratch']
  %s0 = inlined_call_operand.vmem [shape: f32[2,16,8], index: 0, kind: input, shape index: {}]
  %s1 = inlined_call_operand.vmem [shape: f32[2,1,2,8], index: 1, kind: input, shape index: {}]
  %s2 = inlined_call_operand.vmem [shape: f32[3,8,32], index: 2, kind: input, shape index: {}]
  %s3 = inlined_call_operand.hbm [shape: f32[2,16,32], index: 3, kind: output, shape index: {}]
  %s4 = sld [smem:[#allocation0]]
  $region45: #{tpu_custom_call.1} parent=0
    _
  %s6 = ssub.s32 1, %s4
  %s7 = scalar_select 0, %s6, %s4
  $region1: #{tpu_custom_call.1} parent=0
    #allocation2 [shape = 'u8[16384]{0}', space=vmem, size = 0x4000, scoped, tag = 'output window, operand 0']
    #allocation3 [shape = 's32[2]{0}', space=sflag, size = 0x8, scoped, tag = 'scoped memory for tpu_custom_call.1']
    %8 = vsyncpa [#allocation3], 0
    %s9 = scalar_lea.sflag [#allocation3], 1
    %10 = vsyncpa %s9, 0
    loop: start=0, step=1, limit=4
    $region2: #{tpu_custom_call.1} parent=1 // loop_pre_header
      _
    $region3: #{tpu_custom_call.1} parent=1 // loop_header
      %s12 = sphi 0, %s16
      %p13 = scmp.ge.s32.totalorder %s12, 4
      %s19 = sphi 0, %s31
      %s20 = sphi 0, %s27
      %s21 = sphi 0, %s19
      %s22 = sphi 0, %s20
      %s23 = sphi 0, %s21
      %s24 = sphi 0, %s22
      %s36 = sphi 0, %s38
      %s39 = sphi 0, %s36
      %s40 = sphi 0, %s39
      %s56 = sphi 0, %s40
      %s64 = sphi 0, %s66
      %s67 = sphi 0, %s64
      %s68 = sphi 0, %s67
      %s84 = sphi 0, %s68
      %s88 = sphi 0, %s88
      %s90 = sphi 0, %s88
      %s91 = sphi 0, %s90
      %s105 = sphi 0, %s91
      %s113 = sphi 0, %s115
      %s116 = sphi 0, %s113
      %s117 = sphi 0, %s116
      %s133 = sphi 0, %s117
    $region4: #{tpu_custom_call.1} parent=1 // loop_header_branch
      %15 = sbr.rel (%p13) target = $region8
    $region5: #{tpu_custom_call.1} parent=1 // loop_body
      %s17 = ssub.s32 %s12, 1
      %s18 = ssub.s32 %s12, 2
      %s25 = sadd.s32 1, %s20
      %p26 = scmp.ge.s32.totalorder %s25, 1
      %s27 = scalar_select %p26, 0, %s25
      %s28 = sadd.s32 1, %s19
      %s29 = scalar_select %p26, %s28, %s19
      %p30 = scmp.ge.s32.totalorder %s29, 2
      %s31 = scalar_select %p30, 0, %s29
      %s32 = ssub.s32 %s19, %s31
      %s33 = ssub.s32 %s20, %s27
      %s34 = sor.u32 %s32, %s33
      %p35 = scmp.eq.s32.totalorder %s34, 0
      %s37 = sadd.s32 %s36, 1
      %s38 = scalar_select %p35, %s36, %s37
      %p41 = pneg %p35
      %p42 = scmp.eq.s32.totalorder %s12, 1
      %p43 = por %p41, %p42
      %p44 = scmp.ne.s32.totalorder %s36, %s39
      %p45 = scmp.eq.s32.totalorder %s12, 0
      %p46 = por %p44, %p45
      %p47 = scmp.ne.s32.totalorder %s36, %s39
      %p48 = scmp.eq.s32.totalorder %s17, 1
      %p49 = por %p47, %p48
      %p50 = scmp.ne.s32.totalorder %s39, %s40
      %p51 = scmp.eq.s32.totalorder %s17, 0
      %p52 = por %p50, %p51
      %p53 = scmp.ne.s32.totalorder %s39, %s40
      %p54 = scmp.eq.s32.totalorder %s18, 1
      %p55 = por %p53, %p54
      %p57 = scmp.ne.s32.totalorder %s40, %s56
      %p58 = scmp.eq.s32.totalorder %s18, 0
      %p59 = por %p57, %p58
      %s60 = ssub.s32 %s19, %s31
      %s61 = ssub.s32 %s20, %s27
      %s62 = sor.u32 %s60, %s61
      %p63 = scmp.eq.s32.totalorder %s62, 0
      %s65 = sadd.s32 %s64, 1
      %s66 = scalar_select %p63, %s64, %s65
      %p69 = pneg %p63
      %p70 = scmp.eq.s32.totalorder %s12, 1
      %p71 = por %p69, %p70
      %p72 = scmp.ne.s32.totalorder %s64, %s67
      %p73 = scmp.eq.s32.totalorder %s12, 0
      %p74 = por %p72, %p73
      %p75 = scmp.ne.s32.totalorder %s64, %s67
      %p76 = scmp.eq.s32.totalorder %s17, 1
      %p77 = por %p75, %p76
      %p78 = scmp.ne.s32.totalorder %s67, %s68
      %p79 = scmp.eq.s32.totalorder %s17, 0
      %p80 = por %p78, %p79
      %p81 = scmp.ne.s32.totalorder %s67, %s68
      %p82 = scmp.eq.s32.totalorder %s18, 1
      %p83 = por %p81, %p82
      %p85 = scmp.ne.s32.totalorder %s68, %s84
      %p86 = scmp.eq.s32.totalorder %s18, 0
      %p87 = por %p85, %p86
      %s89 = sadd.s32 %s88, 1
      %p92 = scmp.eq.s32.totalorder %s12, 1
      %p93 = scmp.ne.s32.totalorder %s88, %s90
      %p94 = scmp.eq.s32.totalorder %s12, 0
      %p95 = por %p93, %p94
      %p96 = scmp.ne.s32.totalorder %s88, %s90
      %p97 = scmp.eq.s32.totalorder %s17, 1
      %p98 = por %p96, %p97
      %p99 = scmp.ne.s32.totalorder %s90, %s91
      %p100 = scmp.eq.s32.totalorder %s17, 0
      %p101 = por %p99, %p100
      %p102 = scmp.ne.s32.totalorder %s90, %s91
      %p103 = scmp.eq.s32.totalorder %s18, 1
      %p104 = por %p102, %p103
      %p106 = scmp.ne.s32.totalorder %s91, %s105
      %p107 = scmp.eq.s32.totalorder %s18, 0
      %p108 = por %p106, %p107
      %s109 = ssub.s32 %s19, %s31
      %s110 = ssub.s32 %s20, %s27
      %s111 = sor.u32 %s109, %s110
      %p112 = scmp.eq.s32.totalorder %s111, 0
      %s114 = sadd.s32 %s113, 1
      %s115 = scalar_select %p112, %s113, %s114
      %p118 = pneg %p112
      %p119 = scmp.eq.s32.totalorder %s12, 1
      %p120 = por %p118, %p119
      %p121 = scmp.ne.s32.totalorder %s113, %s116
      %p122 = scmp.eq.s32.totalorder %s12, 0
      %p123 = por %p121, %p122
      %p124 = scmp.ne.s32.totalorder %s113, %s116
      %p125 = scmp.eq.s32.totalorder %s17, 1
      %p126 = por %p124, %p125
      %p127 = scmp.ne.s32.totalorder %s116, %s117
      %p128 = scmp.eq.s32.totalorder %s17, 0
      %p129 = por %p127, %p128
      %p130 = scmp.ne.s32.totalorder %s116, %s117
      %p131 = scmp.eq.s32.totalorder %s18, 1
      %p132 = por %p130, %p131
      %p134 = scmp.ne.s32.totalorder %s117, %s133
      %p135 = scmp.eq.s32.totalorder %s18, 0
      %p136 = por %p134, %p135
      %p137 = scmp.le.s32.totalorder 1, %s12
      %p138 = scmp.lt.s32.totalorder %s12, 3
      %p139 = pnand %p137, %p138
      %p140 = pneg %p139
      // Predicated region
      $region9: #{tpu_custom_call.1} parent=5 // pred_check
        _
      $region10: #{tpu_custom_call.1} parent=5 // pred_check_branch
        %142 = sbr.rel (%p139) target = $region12
      $region11: #{tpu_custom_call.1} parent=5 // pred_region
        %s143 = ssub.s32 %s12, 1
        // Predicated region
        $region13: #{tpu_custom_call.1} parent=11 // pred_check
          %p144 = pneg %p101
        $region14: #{tpu_custom_call.1} parent=11 // pred_check_branch
          %146 = sbr.rel (%p144) target = $region16
        $region15: #{tpu_custom_call.1} parent=11 // pred_region
          _
        $region16: #{tpu_custom_call.1} parent=11 // pred_fallthru
          _
      $region12: #{tpu_custom_call.1} parent=5 // pred_fallthru
        _
      %p147 = scmp.lt.s32.totalorder %s12, 2
      // Predicated region
      $region17: #{tpu_custom_call.1} parent=5 // pred_check
        %p148 = pneg %p147
      $region18: #{tpu_custom_call.1} parent=5 // pred_check_branch
        %150 = sbr.rel (%p148) target = $region20
      $region19: #{tpu_custom_call.1} parent=5 // pred_region
        // Predicated region
        $region21: #{tpu_custom_call.1} parent=19 // pred_check
          %p151 = pneg %p46
        $region22: #{tpu_custom_call.1} parent=19 // pred_check_branch
          %153 = sbr.rel (%p151) target = $region24
        $region23: #{tpu_custom_call.1} parent=19 // pred_region
          %s154 = smul.u32 2, %s20
          %p155 = scmp.lt.s32.totalorder %s19, 1
          %s156 = scalar_select %p155, %s19, 1
          %p157 = scmp.lt.s32.totalorder %s154, 1
          %s158 = scalar_select %p157, %s154, 1
          %s159 = smul.addr %s156, 2
          %s160 = sadd.s32 %s158, %s159
          %s161 = smul.addr %s160, 8
          %s162 = scalar_lea.vmem %s0, %s161
          %s163 = smul.u32 2, %s20
        $region24: #{tpu_custom_call.1} parent=19 // pred_fallthru
          _
        // Predicated region
        $region25: #{tpu_custom_call.1} parent=19 // pred_check
          %p164 = pneg %p74
        $region26: #{tpu_custom_call.1} parent=19 // pred_check_branch
          %166 = sbr.rel (%p164) target = $region28
        $region27: #{tpu_custom_call.1} parent=19 // pred_region
          %p167 = scmp.lt.s32.totalorder %s19, 1
          %s168 = scalar_select %p167, %s19, 1
          %p169 = scmp.lt.s32.totalorder %s20, 0
          %s170 = scalar_select %p169, %s20, 0
          %s171 = sadd.s32 %s170, %s168
          %s172 = smul.addr %s171, 2
          %s173 = scalar_lea.vmem %s1, %s172
        $region28: #{tpu_custom_call.1} parent=19 // pred_fallthru
          _
      $region20: #{tpu_custom_call.1} parent=5 // pred_fallthru
        _
      %p174 = scmp.le.s32.totalorder 1, %s12
      %p175 = scmp.lt.s32.totalorder %s12, 3
      %p176 = pnand %p174, %p175
      %p177 = pneg %p176
      // Predicated region
      $region29: #{tpu_custom_call.1} parent=5 // pred_check
        _
      $region30: #{tpu_custom_call.1} parent=5 // pred_check_branch
        %179 = sbr.rel (%p176) target = $region32
      $region31: #{tpu_custom_call.1} parent=5 // pred_region
        %s180 = ssub.s32 %s12, 1
        %s181 = smul.u32 2, %s22
        %p182 = scmp.lt.s32.totalorder %s21, 1
        %s183 = scalar_select %p182, %s21, 1
        %p184 = scmp.lt.s32.totalorder %s181, 1
        %s185 = scalar_select %p184, %s181, 1
        %s186 = smul.addr %s183, 2
        %s187 = sadd.s32 %s185, %s186
        %s188 = smul.addr %s187, 8
        %s189 = scalar_lea.vmem %s0, %s188
        %p190 = pneg %p52
        %p191 = pneg %p49
        %p192 = scmp.lt.s32.totalorder %s21, 1
        %s193 = scalar_select %p192, %s21, 1
        %p194 = scmp.lt.s32.totalorder %s22, 0
        %s195 = scalar_select %p194, %s22, 0
        %s196 = sadd.s32 %s195, %s193
        %s197 = smul.addr %s196, 2
        %s198 = scalar_lea.vmem %s1, %s197
        %p199 = pneg %p80
        %p200 = pneg %p77
        %p201 = pneg %p101
        %p202 = pneg %p98
        %p203 = pneg %p129
        %p204 = pneg %p126
        %s205 = sand.u32 %s116, 1
        %s206 = scalar_lea.sflag [#allocation3], %s205
        %s207 = sand.u32 %s116, 1
        %s208 = smul.addr %s207, 16
        %s209 = scalar_lea.vmem [#allocation2], %s208
        %s210 = smul.u32 2, %s22
        %p211 = scmp.lt.s32.totalorder %s21, 1
        %s212 = scalar_select %p211, %s21, 1
        %p213 = scmp.lt.s32.totalorder %s210, 1
        %s214 = scalar_select %p213, %s210, 1
        %s215 = smul.addr %s212, 2
        %s216 = sadd.s32 %s214, %s215
        %s217 = smul.addr %s216, 8
        %s218 = scalar_lea.vmem %s0, %s217
        %s219 = smul.u32 2, %s22
        %p220 = scmp.lt.s32.totalorder %s21, 1
        %s221 = scalar_select %p220, %s21, 1
        %p222 = scmp.lt.s32.totalorder %s22, 0
        %s223 = scalar_select %p222, %s22, 0
        %s224 = sadd.s32 %s223, %s221
        %s225 = smul.addr %s224, 2
        %s226 = scalar_lea.vmem %s1, %s225
        %s227 = smul.u32 2, %s22
        %v228 = vld [vmem:[%s218] sm:$0xff]
        %v229 = vld [vmem:[%s218 + $0x8] sm:$0xff]
        %v230 = vld [vmem:[%s226] sm:$0x3]
        %v231 = vrot.slane %v228, 7
        %v232 = vrot.slane %v229, 7
        %v233 = vlaneseq
        %v234 = vshrl.u32 %v233, 7
        %vm235 = vcmp.lt.s32.totalorder %v234, 1
        %v236 = vsel %vm235, %v231, %v232
        %v237 = vsel %vm235, %v232, %v231
        %v238 = vrot.slane %v228, 1
        %v239 = vrot.slane %v229, 1
        %vm240 = vcmp.lt.s32.totalorder %v234, 7
        %v241 = vsel %vm240, %v238, %v239
        %v242 = vsel %vm240, %v239, %v238
        %v243 = vadd.s32 %v234, 8
        %vm244 = vcmp.eq.s32.totalorder %v234, 0
        %vm245 = vcmp.eq.s32.totalorder %v243, 0
        %v246 = vlaneseq
        %v247 = vshrl.u32 %v246, 7
        %v248 = vsub.s32 0, %v247
        %v249 = vrot.slane %v230, %v248
        %v250 = vsel %vm244, %v249, %v237
        %v251 = vsel %vm245, %v249, %v236
        %vm252 = vcmp.eq.s32.totalorder %v234, 15
        %vm253 = vcmp.eq.s32.totalorder %v243, 15
        %v254 = vlaneseq
        %v255 = vshrl.u32 %v254, 7
        %v256 = vsub.s32 1, %v255
        %v257 = vrot.slane %v230, %v256
        %v258 = vsel %vm252, %v257, %v241
        %v259 = vsel %vm253, %v257, %v242
        %v260 = vld [vmem:[%s2] sm:$0xff]
        %s261 = scalar_lea.vmem %s2, 8
        %v262 = vld [vmem:[%s261] sm:$0xff]
        %vm263 = vcmask 64512
        %v265 = vsel %vm263, %v228, 0
        %v268 = vsel %vm263, %v229, 0
        %270 = vmatprep.subr.mxu0 0.0
        %271 = vmatpush1.msra.mxu0 %v262
        %272 = vmatprep.subr.mxu0 0.0
        %273 = vmatpush1.msra.mxu0 0.0
        %274 = vmatprep.subr.mxu0 0.0
        %275 = vmatpush1.msra.mxu0 0.0
        %276 = vmatprep.subr.mxu0 0.0
        %277 = vmatpush1.msra.mxu0 0.0
        %278 = vmatprep.subr.mxu0 0.0
        %279 = vmatpush1.msra.mxu0 0.0
        %280 = vmatprep.subr.mxu0 0.0
        %281 = vmatpush1.msra.mxu0 0.0
        %282 = vmatprep.subr.mxu0 0.0
        %283 = vmatpush1.msra.mxu0 0.0
        %284 = vmatprep.subr.mxu0 0.0
        %285 = vmatpush1.msra.mxu0 0.0
        %286 = vmatprep.subr.mxu0 0.0
        %287 = vmatpush1.msra.mxu0 0.0
        %288 = vmatprep.subr.mxu0 0.0
        %289 = vmatpush1.msra.mxu0 0.0
        %290 = vmatprep.subr.mxu0 0.0
        %291 = vmatpush1.msra.mxu0 0.0
        %292 = vmatprep.subr.mxu0 0.0
        %293 = vmatpush1.msra.mxu0 0.0
        %294 = vmatprep.subr.mxu0 0.0
        %295 = vmatpush1.msra.mxu0 0.0
        %296 = vmatprep.subr.mxu0 0.0
        %297 = vmatpush1.msra.mxu0 0.0
        %298 = vmatprep.subr.mxu0 0.0
        %299 = vmatpush1.msra.mxu0 0.0
        %300 = vmatprep.subr.mxu0 0.0
        %301 = vmatpush1.msra.mxu0 0.0
        %302 = vmatprep.subr.mxu0 0.0
        %303 = vmatpush1.msra.mxu0 0.0
        %304 = vmatprep.subr.mxu0 0.0
        %305 = vmatpush1.msra.mxu0 0.0
        %306 = vmatprep.subr.mxu0 0.0
        %307 = vmatpush1.msra.mxu0 0.0
        %308 = vmatprep.subr.mxu0 0.0
        %309 = vmatpush1.msra.mxu0 0.0
        %310 = vmatprep.subr.mxu0 0.0
        %311 = vmatpush1.msra.mxu0 0.0
        %312 = vmatprep.subr.mxu0 0.0
        %313 = vmatpush1.msra.mxu0 0.0
        %314 = vmatprep.subr.mxu0 0.0
        %315 = vmatpush1.msra.mxu0 0.0
        %316 = vmatprep.subr.mxu0 0.0
        %317 = vmatpush1.msra.mxu0 0.0
        %318 = vmatprep.subr.mxu0 0.0
        %319 = vmatpush1.msra.mxu0 0.0
        %320 = vmatprep.subr.mxu0 0.0
        %321 = vmatpush1.msra.mxu0 0.0
        %322 = vmatprep.subr.mxu0 0.0
        %323 = vmatpush1.msra.mxu0 0.0
        %324 = vmatprep.subr.mxu0 0.0
        %325 = vmatpush1.msra.mxu0 0.0
        %326 = vmatprep.subr.mxu0 0.0
        %327 = vmatpush1.msra.mxu0 0.0
        %328 = vmatprep.subr.mxu0 0.0
        %329 = vmatpush1.msra.mxu0 0.0
        %330 = vmatprep.subr.mxu0 0.0
        %331 = vmatpush1.msra.mxu0 0.0
        %332 = vmatprep.subr.mxu0 0.0
        %333 = vmatpush1.msra.mxu0 0.0
        %334 = vmatprep.mubr.f32.mxu0 0.0
        %335 = vmatmul.mubr.f32.gmra.mrb[0].mxu0 %v265
        %v336 = vpop.f32.mrb[0].mxu0
        %v337 = vadd.f32 0.0, %v336
        %v338 = vpop.f32.mrb[0].mxu0
        %339 = vmatprep.mubr.f32.mxu0 0.0
        %340 = vmatmul.mubr.f32.gmra.mrb[0].mxu0 %v268
        %v341 = vpop.f32.mrb[0].mxu0
        %v342 = vadd.f32 0.0, %v341
        %v343 = vpop.f32.mrb[0].mxu0
        %344 = vdwg.mxu0
        %v346 = vsel %vm263, %v250, 0
        %v349 = vsel %vm263, %v251, 0
        %351 = vmatprep.subr.mxu0 0.0
        %352 = vmatpush1.msra.mxu0 %v260
        %353 = vmatprep.subr.mxu0 0.0
        %354 = vmatpush1.msra.mxu0 0.0
        %355 = vmatprep.subr.mxu0 0.0
        %356 = vmatpush1.msra.mxu0 0.0
        %357 = vmatprep.subr.mxu0 0.0
        %358 = vmatpush1.msra.mxu0 0.0
        %359 = vmatprep.subr.mxu0 0.0
        %360 = vmatpush1.msra.mxu0 0.0
        %361 = vmatprep.subr.mxu0 0.0
        %362 = vmatpush1.msra.mxu0 0.0
        %363 = vmatprep.subr.mxu0 0.0
        %364 = vmatpush1.msra.mxu0 0.0
        %365 = vmatprep.subr.mxu0 0.0
        %366 = vmatpush1.msra.mxu0 0.0
        %367 = vmatprep.subr.mxu0 0.0
        %368 = vmatpush1.msra.mxu0 0.0
        %369 = vmatprep.subr.mxu0 0.0
        %370 = vmatpush1.msra.mxu0 0.0
        %371 = vmatprep.subr.mxu0 0.0
        %372 = vmatpush1.msra.mxu0 0.0
        %373 = vmatprep.subr.mxu0 0.0
        %374 = vmatpush1.msra.mxu0 0.0
        %375 = vmatprep.subr.mxu0 0.0
        %376 = vmatpush1.msra.mxu0 0.0
        %377 = vmatprep.subr.mxu0 0.0
        %378 = vmatpush1.msra.mxu0 0.0
        %379 = vmatprep.subr.mxu0 0.0
        %380 = vmatpush1.msra.mxu0 0.0
        %381 = vmatprep.subr.mxu0 0.0
        %382 = vmatpush1.msra.mxu0 0.0
        %383 = vmatprep.subr.mxu0 0.0
        %384 = vmatpush1.msra.mxu0 0.0
        %385 = vmatprep.subr.mxu0 0.0
        %386 = vmatpush1.msra.mxu0 0.0
        %387 = vmatprep.subr.mxu0 0.0
        %388 = vmatpush1.msra.mxu0 0.0
        %389 = vmatprep.subr.mxu0 0.0
        %390 = vmatpush1.msra.mxu0 0.0
        %391 = vmatprep.subr.mxu0 0.0
        %392 = vmatpush1.msra.mxu0 0.0
        %393 = vmatprep.subr.mxu0 0.0
        %394 = vmatpush1.msra.mxu0 0.0
        %395 = vmatprep.subr.mxu0 0.0
        %396 = vmatpush1.msra.mxu0 0.0
        %397 = vmatprep.subr.mxu0 0.0
        %398 = vmatpush1.msra.mxu0 0.0
        %399 = vmatprep.subr.mxu0 0.0
        %400 = vmatpush1.msra.mxu0 0.0
        %401 = vmatprep.subr.mxu0 0.0
        %402 = vmatpush1.msra.mxu0 0.0
        %403 = vmatprep.subr.mxu0 0.0
        %404 = vmatpush1.msra.mxu0 0.0
        %405 = vmatprep.subr.mxu0 0.0
        %406 = vmatpush1.msra.mxu0 0.0
        %407 = vmatprep.subr.mxu0 0.0
        %408 = vmatpush1.msra.mxu0 0.0
        %409 = vmatprep.subr.mxu0 0.0
        %410 = vmatpush1.msra.mxu0 0.0
        %411 = vmatprep.subr.mxu0 0.0
        %412 = vmatpush1.msra.mxu0 0.0
        %413 = vmatprep.subr.mxu0 0.0
        %414 = vmatpush1.msra.mxu0 0.0
        %415 = vmatprep.mubr.f32.mxu0 0.0
        %416 = vmatmul.mubr.f32.gmra.mrb[0].mxu0 %v346
        %v417 = vpop.f32.mrb[0].mxu0
        %v418 = vadd.f32 %v337, %v417
        %v419 = vpop.f32.mrb[0].mxu0
        %420 = vmatprep.mubr.f32.mxu0 0.0
        %421 = vmatmul.mubr.f32.gmra.mrb[0].mxu0 %v349
        %v422 = vpop.f32.mrb[0].mxu0
        %v423 = vadd.f32 %v342, %v422
        %v424 = vpop.f32.mrb[0].mxu0
        %425 = vdwg.mxu0
        %s426 = scalar_lea.vmem %s2, 16
        %v427 = vld [vmem:[%s426] sm:$0xff]
        %v429 = vsel %vm263, %v258, 0
        %v432 = vsel %vm263, %v259, 0
        %434 = vmatprep.subr.mxu0 0.0
        %435 = vmatpush1.msra.mxu0 %v427
        %436 = vmatprep.subr.mxu0 0.0
        %437 = vmatpush1.msra.mxu0 0.0
        %438 = vmatprep.subr.mxu0 0.0
        %439 = vmatpush1.msra.mxu0 0.0
        %440 = vmatprep.subr.mxu0 0.0
        %441 = vmatpush1.msra.mxu0 0.0
        %442 = vmatprep.subr.mxu0 0.0
        %443 = vmatpush1.msra.mxu0 0.0
        %444 = vmatprep.subr.mxu0 0.0
        %445 = vmatpush1.msra.mxu0 0.0
        %446 = vmatprep.subr.mxu0 0.0
        %447 = vmatpush1.msra.mxu0 0.0
        %448 = vmatprep.subr.mxu0 0.0
        %449 = vmatpush1.msra.mxu0 0.0
        %450 = vmatprep.subr.mxu0 0.0
        %451 = vmatpush1.msra.mxu0 0.0
        %452 = vmatprep.subr.mxu0 0.0
        %453 = vmatpush1.msra.mxu0 0.0
        %454 = vmatprep.subr.mxu0 0.0
        %455 = vmatpush1.msra.mxu0 0.0
        %456 = vmatprep.subr.mxu0 0.0
        %457 = vmatpush1.msra.mxu0 0.0
        %458 = vmatprep.subr.mxu0 0.0
        %459 = vmatpush1.msra.mxu0 0.0
        %460 = vmatprep.subr.mxu0 0.0
        %461 = vmatpush1.msra.mxu0 0.0
        %462 = vmatprep.subr.mxu0 0.0
        %463 = vmatpush1.msra.mxu0 0.0
        %464 = vmatprep.subr.mxu0 0.0
        %465 = vmatpush1.msra.mxu0 0.0
        %466 = vmatprep.subr.mxu0 0.0
        %467 = vmatpush1.msra.mxu0 0.0
        %468 = vmatprep.subr.mxu0 0.0
        %469 = vmatpush1.msra.mxu0 0.0
        %470 = vmatprep.subr.mxu0 0.0
        %471 = vmatpush1.msra.mxu0 0.0
        %472 = vmatprep.subr.mxu0 0.0
        %473 = vmatpush1.msra.mxu0 0.0
        %474 = vmatprep.subr.mxu0 0.0
        %475 = vmatpush1.msra.mxu0 0.0
        %476 = vmatprep.subr.mxu0 0.0
        %477 = vmatpush1.msra.mxu0 0.0
        %478 = vmatprep.subr.mxu0 0.0
        %479 = vmatpush1.msra.mxu0 0.0
        %480 = vmatprep.subr.mxu0 0.0
        %481 = vmatpush1.msra.mxu0 0.0
        %482 = vmatprep.subr.mxu0 0.0
        %483 = vmatpush1.msra.mxu0 0.0
        %484 = vmatprep.subr.mxu0 0.0
        %485 = vmatpush1.msra.mxu0 0.0
        %486 = vmatprep.subr.mxu0 0.0
        %487 = vmatpush1.msra.mxu0 0.0
        %488 = vmatprep.subr.mxu0 0.0
        %489 = vmatpush1.msra.mxu0 0.0
        %490 = vmatprep.subr.mxu0 0.0
        %491 = vmatpush1.msra.mxu0 0.0
        %492 = vmatprep.subr.mxu0 0.0
        %493 = vmatpush1.msra.mxu0 0.0
        %494 = vmatprep.subr.mxu0 0.0
        %495 = vmatpush1.msra.mxu0 0.0
        %496 = vmatprep.subr.mxu0 0.0
        %497 = vmatpush1.msra.mxu0 0.0
        %498 = vmatprep.mubr.f32.mxu0 0.0
        %499 = vmatmul.mubr.f32.gmra.mrb[0].mxu0 %v429
        %v500 = vpop.f32.mrb[0].mxu0
        %v501 = vadd.f32 0.0, %v500
        %v502 = vpop.f32.mrb[0].mxu0
        %503 = vmatprep.mubr.f32.mxu0 0.0
        %504 = vmatmul.mubr.f32.gmra.mrb[0].mxu0 %v432
        %v505 = vpop.f32.mrb[0].mxu0
        %v506 = vadd.f32 0.0, %v505
        %v507 = vpop.f32.mrb[0].mxu0
        %508 = vdwg.mxu0
        %v509 = vadd.f32 %v418, %v501
        %v510 = vadd.f32 %v423, %v506
        %vm511 = vcmask 261120
        %512 = vst.msk [vmem:[%s209] sm:$0xff] %vm511, %v509
        %513 = vst.msk [vmem:[%s209 + $0x8] sm:$0xff] %vm511, %v510
        %s514 = sand.u32 %s116, 1
        %s515 = scalar_lea.sflag [#allocation3], %s514
        %s516 = sand.u32 %s116, 1
        %s517 = smul.addr %s516, 16
        %s518 = scalar_lea.vmem [#allocation2], %s517
        // Predicated region
        $region33: #{tpu_custom_call.1} parent=31 // pred_check
          %p519 = pneg %p126
        $region34: #{tpu_custom_call.1} parent=31 // pred_check_branch
          %521 = sbr.rel (%p519) target = $region36
        $region35: #{tpu_custom_call.1} parent=31 // pred_region
          %s522 = smul.u32 2, %s22
          %s524 = ssub.s32 256, 256
          %525 = vsyncadd %s515, %s524
          %s526 = smul.addr %s21, 2
          %s527 = sadd.s32 %s522, %s526
          %s528 = smul.addr %s527, 128
          %s529 = scalar_lea.hbm %s3, %s528
          %s530 = sshll.u32 %s518, 4
          %s531 = int_to_ptr.vmem [resolvable:$true] %s530
          %536 = dma.vmem_to_hbm [thread:$0]  %s531, 256, %s529, %s515, 128, 128, 8
        $region36: #{tpu_custom_call.1} parent=31 // pred_fallthru
          _
      $region32: #{tpu_custom_call.1} parent=5 // pred_fallthru
        _
      %p537 = scmp.le.s32.totalorder 2, %s12
      // Predicated region
      $region37: #{tpu_custom_call.1} parent=5 // pred_check
        %p538 = pneg %p537
      $region38: #{tpu_custom_call.1} parent=5 // pred_check_branch
        %540 = sbr.rel (%p538) target = $region40
      $region39: #{tpu_custom_call.1} parent=5 // pred_region
        %s541 = ssub.s32 %s12, 2
        // Predicated region
        $region41: #{tpu_custom_call.1} parent=39 // pred_check
          %p542 = pneg %p132
        $region42: #{tpu_custom_call.1} parent=39 // pred_check_branch
          %544 = sbr.rel (%p542) target = $region44
        $region43: #{tpu_custom_call.1} parent=39 // pred_region
          %s545 = sand.u32 %s117, 1
          %s546 = scalar_lea.sflag [#allocation3], %s545
          %s547 = sand.u32 %s117, 1
          %s548 = smul.addr %s547, 16
          %s549 = scalar_lea.vmem [#allocation2], %s548
          %550 = dma.done %s546, 256
        $region44: #{tpu_custom_call.1} parent=39 // pred_fallthru
          _
      $region40: #{tpu_custom_call.1} parent=5 // pred_fallthru
        _
    $region6: #{tpu_custom_call.1} parent=1 // loop_footer
      %s16 = sadd.s32 1, %s12
    $region7: #{tpu_custom_call.1} parent=1 // loop_footer_branch
      %11 = sbr.rel target = $region3
    $region8: #{tpu_custom_call.1} parent=1 // loop_exit
      _
    %551 = vsyncpa [#allocation3], 1
    %s552 = scalar_lea.sflag [#allocation3], 1
    %553 = vsyncpa %s552, 1

</llo_original>
